<compile_context>
chip_gen: v7x
topology: tpu7x:2x2x1
jax: 0.10.0
libtpu: 0.0.40
codegen_flags: <defaults>
</compile_context>

<pallas_src>
import jax
import jax.numpy as jnp
from jax.experimental import pallas as pl
from jax.experimental.pallas import tpu as pltpu


def _round_up(a: int, b: int) -> int:
    return -(-a // b) * b


def _make_kernel(num_parents: int, dim_out: int):
    P = num_parents

    def kernel(x_ref, pvx_ref, wc_ref, bc_ref, o_ref):
        # Single fused matmul: columns [node | edge_0 | ... | edge_{P-1}]
        y = jnp.dot(x_ref[...], wc_ref[...],
                    preferred_element_type=jnp.float32)          # (tn, (P+1)*dim_out)
        y = y + bc_ref[...]

        acc = y[:, :dim_out]                                     # node(x)
        # Scale edge part by parent values (pre-expanded to (tn, P*dim_out))
        edge = y[:, dim_out:] * pvx_ref[...]
        for k in range(P):                                       # P small & static
            acc = acc + edge[:, k * dim_out:(k + 1) * dim_out]

        o_ref[...] = acc.astype(o_ref.dtype)

    return kernel


def linear_scale_shift(x, parent_vals, W_edge, b_edge, W_node, b_node,
                       dim_out, num_parents, *, tn=None):
    """Pallas forward of LinearScaleShift.

    x:           (N, dim_in)       float32
    parent_vals: (N, num_parents)  float32
    W_edge:      (dim_out*num_parents, dim_in)   (PyTorch Linear layout)
    b_edge:      (dim_out*num_parents,)
    W_node:      (dim_out, dim_in)
    b_node:      (dim_out,)
    returns:     (N, dim_out)
    """
    N, dim_in = x.shape
    P = num_parents

    # --- tile selection: big tiles to amortize per-step overhead & fill MXU,
    #     but keep grid >= 2 whenever N is large enough (v7x megacore). ---
    if tn is None:
        grid_n = max(1, -(-N // 512))          # number of grid steps if tn<=512
        tn = _round_up(-(-N // grid_n), 8)     # balanced tile, multiple of 8
    tn = max(8, (tn // 8) * 8)
    N_pad = _round_up(N, tn)

    # --- weight pre-packing (plain JAX glue; pack once if weights are static) ---
    # edge_eval reshape gives element [i, j, k] = (x @ W_edge.T + b_edge)[i, j*P + k]
    # so the per-parent slice is We_pack[k, d, j] = W_edge[j*P + k, d].
    We_pack = jnp.transpose(W_edge.reshape(dim_out, P, dim_in), (1, 2, 0))  # (P, dim_in, dim_out)
    We_flat = jnp.transpose(We_pack, (1, 0, 2)).reshape(dim_in, P * dim_out)
    Wn_t = W_node.T                                                          # (dim_in, dim_out)
    W_cat = jnp.concatenate([Wn_t, We_flat], axis=1)        # (dim_in, (P+1)*dim_out)

    be_pack = b_edge.reshape(dim_out, P).T                   # (P, dim_out)
    b_cat = jnp.concatenate([b_node, be_pack.reshape(P * dim_out)])
    b_cat = b_cat.reshape(1, (P + 1) * dim_out)

    # Parent values expanded so column k*dim_out + j carries pv[:, k]
    pv_expand = jnp.repeat(parent_vals, dim_out, axis=1)     # (N, P*dim_out)

    # --- pad the row dimension to a multiple of tn (tail rows are zeros) ---
    if N_pad != N:
        x_in = jnp.pad(x, ((0, N_pad - N), (0, 0)))
        pvx_in = jnp.pad(pv_expand, ((0, N_pad - N), (0, 0)))
    else:
        x_in, pvx_in = x, pv_expand

    kernel = _make_kernel(P, dim_out)

    out = pl.pallas_call(
        kernel,
        out_shape=jax.ShapeDtypeStruct((N_pad, dim_out), x.dtype),
        grid_spec=pltpu.PrefetchScalarGridSpec(
            num_scalar_prefetch=0,
            grid=(N_pad // tn,),
            in_specs=[
                pl.BlockSpec((tn, dim_in), lambda i: (i, 0)),              # x tile
                pl.BlockSpec((tn, P * dim_out), lambda i: (i, 0)),         # expanded parent vals
                pl.BlockSpec((dim_in, (P + 1) * dim_out), lambda i: (0, 0)),  # fused weight
                pl.BlockSpec((1, (P + 1) * dim_out), lambda i: (0, 0)),       # fused bias
            ],
            out_specs=pl.BlockSpec((tn, dim_out), lambda i: (i, 0)),
        ),
        compiler_params=pltpu.CompilerParams(
            dimension_semantics=("parallel",)),
    )(x_in, pvx_in, W_cat, b_cat)

    return out[:N]


def _reference(x, parent_vals, W_edge, b_edge, W_node, b_node, dim_out, P):
    """Pure-JAX mirror of the PyTorch forward (for verification)."""
    edge_eval = x @ W_edge.T + b_edge                      # (N, dim_out*P)
    edge_eval = edge_eval.reshape(x.shape[0], dim_out, P)  # (N, dim_out, P)
    edge_func = jnp.einsum('ijk,ik->ij', edge_eval, parent_vals)
    node_func = x @ W_node.T + b_node
    return edge_func + node_func


if __name__ == "__main__":
    dim_in = 32
    dim_out = 16
    P = 4             # num_parent_vals_in

    key = jax.random.PRNGKey(0)
    k_x, k_pv, k_we, k_be, k_wn, k_bn = jax.random.split(key, 6)

    # Deterministic parameter init, mimicking torch.nn.Linear's U(-1/sqrt(fan_in), +).
    bound = 1.0 / (dim_in ** 0.5)
    W_edge = jax.random.uniform(k_we, (dim_out * P, dim_in), jnp.float32, -bound, bound)
    b_edge = jax.random.uniform(k_be, (dim_out * P,), jnp.float32, -bound, bound)
    W_node = jax.random.uniform(k_wn, (dim_out, dim_in), jnp.float32, -bound, bound)
    b_node = jax.random.uniform(k_bn, (dim_out,), jnp.float32, -bound, bound)

    # Case 1: small, tile-aligned batch.
    N = 16
    x = jax.random.normal(k_x, (N, dim_in), dtype=jnp.float32)
    parent_vals = jax.random.normal(k_pv, (N, P), dtype=jnp.float32)
    out = linear_scale_shift(x, parent_vals, W_edge, b_edge, W_node, b_node, dim_out, P)
    out = jax.block_until_ready(out)
    ref = _reference(x, parent_vals, W_edge, b_edge, W_node, b_node, dim_out, P)
    assert out.shape == (N, dim_out)
    assert jnp.allclose(out, ref, atol=1e-4, rtol=1e-4)

    # Case 2: non-multiple-of-8 batch (exercises the padded-tail path).
    N2 = 41
    x2 = jax.random.normal(jax.random.PRNGKey(1), (N2, dim_in), dtype=jnp.float32)
    pv2 = jax.random.normal(jax.random.PRNGKey(2), (N2, P), dtype=jnp.float32)
    out2 = linear_scale_shift(x2, pv2, W_edge, b_edge, W_node, b_node, dim_out, P)
    out2 = jax.block_until_ready(out2)
    ref2 = _reference(x2, pv2, W_edge, b_edge, W_node, b_node, dim_out, P)
    assert out2.shape == (N2, dim_out)
    assert jnp.allclose(out2, ref2, atol=1e-4, rtol=1e-4)

    print("KERNEL_OK")
</pallas_src>

<mosaic_0001>
module attributes {stable_mosaic.version = 11 : i64} {
  func.func @kernel(%arg0: i32, %arg1: memref<16x32xf32, #tpu.memory_space<vmem>>, %arg2: memref<16x64xf32, #tpu.memory_space<vmem>>, %arg3: memref<32x80xf32, #tpu.memory_space<vmem>>, %arg4: memref<1x80xf32, #tpu.memory_space<vmem>>, %arg5: memref<16x16xf32, #tpu.memory_space<vmem>>) attributes {dimension_semantics = [#tpu.dimension_semantics<parallel>], iteration_bounds = array<i64: 1>, scalar_prefetch = 0 : i64, scratch_operands = 0 : i64, tpu.core_type = #tpu.core_type<tc>, window_params = [{transform_indices = @transform_0, window_bounds = array<i64: 16, 32>}, {transform_indices = @transform_1, window_bounds = array<i64: 16, 64>}, {pipeline_mode = #tpu.pipeline_mode<synchronous>, transform_indices = @transform_2, window_bounds = array<i64: 32, 80>}, {pipeline_mode = #tpu.pipeline_mode<synchronous>, transform_indices = @transform_3, window_bounds = array<i64: 1, 80>}, {transform_indices = @transform_4, window_bounds = array<i64: 16, 16>}]} {
    %c0 = arith.constant 0 : index
    %c0_0 = arith.constant 0 : index
    %0 = vector.load %arg1[%c0, %c0_0] : memref<16x32xf32, #tpu.memory_space<vmem>>, vector<16x32xf32>
    %c0_1 = arith.constant 0 : index
    %c0_2 = arith.constant 0 : index
    %1 = vector.load %arg3[%c0_1, %c0_2] : memref<32x80xf32, #tpu.memory_space<vmem>>, vector<32x80xf32>
    %cst = arith.constant dense<0.000000e+00> : vector<16x80xf32>
    %2 = tpu.matmul %0, %1, %cst {dimension_numbers = #tpu.dot_dimension_numbers<[1], [0], [0], [1], [0, 0, 1, 1], [], []>} : vector<16x32xf32>, vector<32x80xf32>, vector<16x80xf32> -> vector<16x80xf32>
    %c0_3 = arith.constant 0 : index
    %c0_4 = arith.constant 0 : index
    %3 = vector.load %arg4[%c0_3, %c0_4] : memref<1x80xf32, #tpu.memory_space<vmem>>, vector<1x80xf32>
    %4 = vector.broadcast %3 : vector<1x80xf32> to vector<16x80xf32>
    %5 = arith.addf %2, %4 : vector<16x80xf32>
    %6 = vector.extract_strided_slice %5 {offsets = [0, 0], sizes = [16, 16], strides = [1, 1]} : vector<16x80xf32> to vector<16x16xf32>
    %7 = vector.extract_strided_slice %5 {offsets = [0, 16], sizes = [16, 64], strides = [1, 1]} : vector<16x80xf32> to vector<16x64xf32>
    %c0_5 = arith.constant 0 : index
    %c0_6 = arith.constant 0 : index
    %8 = vector.load %arg2[%c0_5, %c0_6] : memref<16x64xf32, #tpu.memory_space<vmem>>, vector<16x64xf32>
    %9 = arith.mulf %7, %8 : vector<16x64xf32>
    %10 = vector.extract_strided_slice %9 {offsets = [0, 0], sizes = [16, 16], strides = [1, 1]} : vector<16x64xf32> to vector<16x16xf32>
    %11 = arith.addf %6, %10 : vector<16x16xf32>
    %12 = vector.extract_strided_slice %9 {offsets = [0, 16], sizes = [16, 16], strides = [1, 1]} : vector<16x64xf32> to vector<16x16xf32>
    %13 = arith.addf %11, %12 : vector<16x16xf32>
    %14 = vector.extract_strided_slice %9 {offsets = [0, 32], sizes = [16, 16], strides = [1, 1]} : vector<16x64xf32> to vector<16x16xf32>
    %15 = arith.addf %13, %14 : vector<16x16xf32>
    %16 = vector.extract_strided_slice %9 {offsets = [0, 48], sizes = [16, 16], strides = [1, 1]} : vector<16x64xf32> to vector<16x16xf32>
    %17 = arith.addf %15, %16 : vector<16x16xf32>
    %c0_7 = arith.constant 0 : index
    %c0_8 = arith.constant 0 : index
    %18 = vector.load %arg5[%c0_7, %c0_8] : memref<16x16xf32, #tpu.memory_space<vmem>>, vector<16x16xf32>
    tpu.vector_store %arg5[%c0_7, %c0_8], %17 {strides = array<i32>} : memref<16x16xf32, #tpu.memory_space<vmem>>, vector<16x16xf32>,
    return
  }
  func.func @transform_0(%arg0: i32) -> (i32, i32) {
    %c0_i32 = arith.constant 0 : i32
    %c0_i32_0 = arith.constant 0 : i32
    return %arg0, %c0_i32 : i32, i32
  }
  func.func @transform_1(%arg0: i32) -> (i32, i32) {
    %c0_i32 = arith.constant 0 : i32
    %c0_i32_0 = arith.constant 0 : i32
    return %arg0, %c0_i32 : i32, i32
  }
  func.func @transform_2(%arg0: i32) -> (i32, i32) {
    %c0_i32 = arith.constant 0 : i32
    %c0_i32_0 = arith.constant 0 : i32
    %c0_i32_1 = arith.constant 0 : i32
    return %c0_i32, %c0_i32_0 : i32, i32
  }
  func.func @transform_3(%arg0: i32) -> (i32, i32) {
    %c0_i32 = arith.constant 0 : i32
    %c0_i32_0 = arith.constant 0 : i32
    %c0_i32_1 = arith.constant 0 : i32
    return %c0_i32, %c0_i32_0 : i32, i32
  }
  func.func @transform_4(%arg0: i32) -> (i32, i32) {
    %c0_i32 = arith.constant 0 : i32
    %c0_i32_0 = arith.constant 0 : i32
    return %arg0, %c0_i32 : i32, i32
  }
}

</mosaic_0001>

<llo_original>
// kernel: tpu_custom_call.1
$region0: #{tpu_custom_call.1}
  #allocation0 [shape = 'u32[]', space=smem, size = 0x4, offset = 0x4, fixed_abs, tag = 'smem constant byte address 0x4 - core index']
  #allocation1 [shape = 'u32[144,128]{1,0:T(1,128)}', space=vmem, size = 0x12000, scoped, tag = 'internal scratch']
  %s0 = inlined_call_operand.hbm [shape: f32[16,32], index: 0, kind: input, shape index: {}]
  %s1 = inlined_call_operand.hbm [shape: f32[16,64], index: 1, kind: input, shape index: {}]
  %s2 = inlined_call_operand.hbm [shape: f32[32,80], index: 2, kind: input, shape index: {}]
  %s3 = inlined_call_operand.vmem [shape: f32[1,80], index: 3, kind: input, shape index: {}]
  %s4 = inlined_call_operand.hbm [shape: f32[16,16], index: 4, kind: output, shape index: {}]
  %s5 = sld [smem:[#allocation0]]
  $region38: #{tpu_custom_call.1} parent=0
    _
  %s7 = ssub.s32 1, %s5
  %s8 = scalar_select 0, %s7, %s5
  $region1: #{tpu_custom_call.1} parent=0
    #allocation2 [shape = 'u8[8192]{0}', space=vmem, size = 0x2000, scoped, tag = 'input window, operand 0, single buffered']
    #allocation3 [shape = 's32[1]{0}', space=sflag, size = 0x4, scoped, tag = 'scoped memory for tpu_custom_call.1']
    #allocation4 [shape = 's32[1]{0}', space=sflag, size = 0x4, scoped, tag = 'scoped memory for tpu_custom_call.1']
    #allocation5 [shape = 'u8[8192]{0}', space=vmem, size = 0x2000, scoped, tag = 'input window, operand 1, single buffered']
    #allocation6 [shape = 's32[1]{0}', space=sflag, size = 0x4, scoped, tag = 'scoped memory for tpu_custom_call.1']
    #allocation7 [shape = 'u8[16384]{0}', space=vmem, size = 0x4000, scoped, tag = 'input window, operand 2, single buffered']
    #allocation8 [shape = 'u8[8192]{0}', space=vmem, size = 0x2000, scoped, tag = 'output window, operand 0, single buffered']
    %9 = vsyncpa [#allocation3], 0
    %10 = vsyncpa [#allocation6], 0
    %11 = vsyncpa [#allocation4], 0
    // Predicated region
    $region2: #{tpu_custom_call.1} parent=1 // pred_check
      _
    $region3: #{tpu_custom_call.1} parent=1 // pred_check_branch
      %13 = sbr.rel (0) target = $region5
    $region4: #{tpu_custom_call.1} parent=1 // pred_region
      %s15 = ssub.s32 256, 256
      %16 = vsyncadd [#allocation3], %s15
      %s17 = sshll.u32 [#allocation2], 4
      %s18 = int_to_ptr.vmem [resolvable:$true] %s17
      %23 = dma.hbm_to_vmem [thread:$0]  %s0, 256, %s18, [#allocation3], 128, 128, 8
    $region5: #{tpu_custom_call.1} parent=1 // pred_fallthru
      _
    // Predicated region
    $region6: #{tpu_custom_call.1} parent=1 // pred_check
      _
    $region7: #{tpu_custom_call.1} parent=1 // pred_check_branch
      %25 = sbr.rel (0) target = $region9
    $region8: #{tpu_custom_call.1} parent=1 // pred_region
      %s27 = ssub.s32 256, 256
      %28 = vsyncadd [#allocation6], %s27
      %s29 = sshll.u32 [#allocation5], 4
      %s30 = int_to_ptr.vmem [resolvable:$true] %s29
      %35 = dma.hbm_to_vmem [thread:$0]  %s1, 256, %s30, [#allocation6], 128, 128, 8
    $region9: #{tpu_custom_call.1} parent=1 // pred_fallthru
      _
    // Predicated region
    $region10: #{tpu_custom_call.1} parent=1 // pred_check
      _
    $region11: #{tpu_custom_call.1} parent=1 // pred_check_branch
      %37 = sbr.rel (0) target = $region13
    $region12: #{tpu_custom_call.1} parent=1 // pred_region
      %s39 = ssub.s32 512, 512
      %40 = vsyncadd [#allocation6], %s39
      %s41 = sshll.u32 [#allocation7], 4
      %s42 = int_to_ptr.vmem [resolvable:$true] %s41
      %47 = dma.hbm_to_vmem [thread:$0]  %s2, 512, %s42, [#allocation6], 128, 128, 8
    $region13: #{tpu_custom_call.1} parent=1 // pred_fallthru
      _
    // Predicated region
    $region14: #{tpu_custom_call.1} parent=1 // pred_check
      _
    $region15: #{tpu_custom_call.1} parent=1 // pred_check_branch
      %49 = sbr.rel (0) target = $region17
    $region16: #{tpu_custom_call.1} parent=1 // pred_region
      _
    $region17: #{tpu_custom_call.1} parent=1 // pred_fallthru
      _
    // Predicated region
    $region18: #{tpu_custom_call.1} parent=1 // pred_check
      _
    $region19: #{tpu_custom_call.1} parent=1 // pred_check_branch
      %51 = sbr.rel (0) target = $region21
    $region20: #{tpu_custom_call.1} parent=1 // pred_region
      %52 = dma.done [#allocation3], 256
    $region21: #{tpu_custom_call.1} parent=1 // pred_fallthru
      _
    // Predicated region
    $region22: #{tpu_custom_call.1} parent=1 // pred_check
      _
    $region23: #{tpu_custom_call.1} parent=1 // pred_check_branch
      %54 = sbr.rel (0) target = $region25
    $region24: #{tpu_custom_call.1} parent=1 // pred_region
      %55 = dma.done [#allocation6], 256
    $region25: #{tpu_custom_call.1} parent=1 // pred_fallthru
      _
    // Predicated region
    $region26: #{tpu_custom_call.1} parent=1 // pred_check
      _
    $region27: #{tpu_custom_call.1} parent=1 // pred_check_branch
      %57 = sbr.rel (0) target = $region29
    $region28: #{tpu_custom_call.1} parent=1 // pred_region
      %58 = dma.done [#allocation6], 512
    $region29: #{tpu_custom_call.1} parent=1 // pred_fallthru
      _
    %v59 = vld [vmem:[#allocation2] sm:$0xff]
    %v60 = vld [vmem:[#allocation2 + $0x8] sm:$0xff]
    %v61 = vld [vmem:[#allocation7] sm:$0xff]
    %v62 = vld [vmem:[#allocation7 + $0x8] sm:$0xff]
    %v63 = vld [vmem:[#allocation7 + $0x10] sm:$0xff]
    %v64 = vld [vmem:[#allocation7 + $0x18] sm:$0xff]
    %v65 = vld [vmem:[%s3] sm:$0x1]
    %v67 = vlaneseq
    %v68 = vshrl.u32 %v67, 7
    %v69 = vsub.s32 0, %v68
    %v70 = vrot.slane %v65, %v69
    %vm72 = vcmask 261120
    %v74 = vsel %vm72, %v59, 0
    %v77 = vsel %vm72, %v60, 0
    %79 = vmatprep.subr.mxu0 0.0
    %80 = vmatpush1.msra.mxu0 %v61
    %81 = vmatprep.subr.mxu0 0.0
    %82 = vmatpush1.msra.mxu0 %v62
    %83 = vmatprep.subr.mxu0 0.0
    %84 = vmatpush1.msra.mxu0 %v63
    %85 = vmatprep.subr.mxu0 0.0
    %86 = vmatpush1.msra.mxu0 %v64
    %87 = vmatprep.subr.mxu0 0.0
    %88 = vmatpush1.msra.mxu0 0.0
    %89 = vmatprep.subr.mxu0 0.0
    %90 = vmatpush1.msra.mxu0 0.0
    %91 = vmatprep.subr.mxu0 0.0
    %92 = vmatpush1.msra.mxu0 0.0
    %93 = vmatprep.subr.mxu0 0.0
    %94 = vmatpush1.msra.mxu0 0.0
    %95 = vmatprep.subr.mxu0 0.0
    %96 = vmatpush1.msra.mxu0 0.0
    %97 = vmatprep.subr.mxu0 0.0
    %98 = vmatpush1.msra.mxu0 0.0
    %99 = vmatprep.subr.mxu0 0.0
    %100 = vmatpush1.msra.mxu0 0.0
    %101 = vmatprep.subr.mxu0 0.0
    %102 = vmatpush1.msra.mxu0 0.0
    %103 = vmatprep.subr.mxu0 0.0
    %104 = vmatpush1.msra.mxu0 0.0
    %105 = vmatprep.subr.mxu0 0.0
    %106 = vmatpush1.msra.mxu0 0.0
    %107 = vmatprep.subr.mxu0 0.0
    %108 = vmatpush1.msra.mxu0 0.0
    %109 = vmatprep.subr.mxu0 0.0
    %110 = vmatpush1.msra.mxu0 0.0
    %111 = vmatprep.subr.mxu0 0.0
    %112 = vmatpush1.msra.mxu0 0.0
    %113 = vmatprep.subr.mxu0 0.0
    %114 = vmatpush1.msra.mxu0 0.0
    %115 = vmatprep.subr.mxu0 0.0
    %116 = vmatpush1.msra.mxu0 0.0
    %117 = vmatprep.subr.mxu0 0.0
    %118 = vmatpush1.msra.mxu0 0.0
    %119 = vmatprep.subr.mxu0 0.0
    %120 = vmatpush1.msra.mxu0 0.0
    %121 = vmatprep.subr.mxu0 0.0
    %122 = vmatpush1.msra.mxu0 0.0
    %123 = vmatprep.subr.mxu0 0.0
    %124 = vmatpush1.msra.mxu0 0.0
    %125 = vmatprep.subr.mxu0 0.0
    %126 = vmatpush1.msra.mxu0 0.0
    %127 = vmatprep.subr.mxu0 0.0
    %128 = vmatpush1.msra.mxu0 0.0
    %129 = vmatprep.subr.mxu0 0.0
    %130 = vmatpush1.msra.mxu0 0.0
    %131 = vmatprep.subr.mxu0 0.0
    %132 = vmatpush1.msra.mxu0 0.0
    %133 = vmatprep.subr.mxu0 0.0
    %134 = vmatpush1.msra.mxu0 0.0
    %135 = vmatprep.subr.mxu0 0.0
    %136 = vmatpush1.msra.mxu0 0.0
    %137 = vmatprep.subr.mxu0 0.0
    %138 = vmatpush1.msra.mxu0 0.0
    %139 = vmatprep.subr.mxu0 0.0
    %140 = vmatpush1.msra.mxu0 0.0
    %141 = vmatprep.subr.mxu0 0.0
    %142 = vmatpush1.msra.mxu0 0.0
    %143 = vmatprep.mubr.f32.mxu0 0.0
    %144 = vmatmul.mubr.f32.gmra.mrb[0].mxu0 %v74
    %v145 = vpop.f32.mrb[0].mxu0
    %v146 = vadd.f32 %v70, %v145
    %v147 = vpop.f32.mrb[0].mxu0
    %148 = vmatprep.mubr.f32.mxu0 0.0
    %149 = vmatmul.mubr.f32.gmra.mrb[0].mxu0 %v77
    %v150 = vpop.f32.mrb[0].mxu0
    %v151 = vadd.f32 %v70, %v150
    %v152 = vpop.f32.mrb[0].mxu0
    %153 = vdwg.mxu0
    %v154 = vld [vmem:[#allocation5] sm:$0xff]
    %v155 = vld [vmem:[#allocation5 + $0x8] sm:$0xff]
    %158 = vrot.lane.b32.xlu0 %v154, 16
    %v159 = vpop.permute.xlu0 %158
    %160 = vrot.lane.b32.xlu0 %v155, 16
    %v161 = vpop.permute.xlu0 %160
    %v164 = vmul.f32 %v146, %v159
    %v165 = vmul.f32 %v151, %v161
    %168 = vrot.lane.b32.xlu0 %v164, 112
    %v169 = vpop.permute.xlu0 %168
    %170 = vrot.lane.b32.xlu0 %v165, 112
    %v171 = vpop.permute.xlu0 %170
    %v174 = vadd.f32 %v146, %v169
    %v175 = vadd.f32 %v151, %v171
    %176 = vrot.lane.b32.xlu0 %v164, 96
    %v177 = vpop.permute.xlu0 %176
    %178 = vrot.lane.b32.xlu0 %v165, 96
    %v179 = vpop.permute.xlu0 %178
    %v182 = vadd.f32 %v174, %v177
    %v183 = vadd.f32 %v175, %v179
    %184 = vrot.lane.b32.xlu0 %v164, 80
    %v185 = vpop.permute.xlu0 %184
    %186 = vrot.lane.b32.xlu0 %v165, 80
    %v187 = vpop.permute.xlu0 %186
    %v190 = vadd.f32 %v182, %v185
    %v191 = vadd.f32 %v183, %v187
    %192 = vrot.lane.b32.xlu0 %v164, 64
    %v193 = vpop.permute.xlu0 %192
    %194 = vrot.lane.b32.xlu0 %v165, 64
    %v195 = vpop.permute.xlu0 %194
    %v198 = vadd.f32 %v190, %v193
    %v199 = vadd.f32 %v191, %v195
    %vm200 = vcmask 130048
    %201 = vst.msk [vmem:[#allocation8] sm:$0xff] %vm200, %v198
    %202 = vst.msk [vmem:[#allocation8 + $0x8] sm:$0xff] %vm200, %v199
    // Predicated region
    $region30: #{tpu_custom_call.1} parent=1 // pred_check
      _
    $region31: #{tpu_custom_call.1} parent=1 // pred_check_branch
      %204 = sbr.rel (0) target = $region33
    $region32: #{tpu_custom_call.1} parent=1 // pred_region
      %s206 = ssub.s32 256, 256
      %207 = vsyncadd [#allocation4], %s206
      %s208 = sshll.u32 [#allocation8], 4
      %s209 = int_to_ptr.vmem [resolvable:$true] %s208
      %214 = dma.vmem_to_hbm [thread:$0]  %s209, 256, %s4, [#allocation4], 128, 128, 8
    $region33: #{tpu_custom_call.1} parent=1 // pred_fallthru
      _
    // Predicated region
    $region34: #{tpu_custom_call.1} parent=1 // pred_check
      _
    $region35: #{tpu_custom_call.1} parent=1 // pred_check_branch
      %216 = sbr.rel (0) target = $region37
    $region36: #{tpu_custom_call.1} parent=1 // pred_region
      %217 = dma.done [#allocation4], 256
    $region37: #{tpu_custom_call.1} parent=1 // pred_fallthru
      _
    %218 = vsyncpa [#allocation3], 1
    %219 = vsyncpa [#allocation6], 1
    %220 = vsyncpa [#allocation4], 1

</llo_original>
